<compile_context>
chip_gen: v6e
topology: v6e:2x2x1
jax: 0.10.0
libtpu: 0.0.40
codegen_flags: <defaults>
</compile_context>

<pallas_src>
import jax
import jax.numpy as jnp
from jax.experimental import pallas as pl
from jax.experimental.pallas import tpu as pltpu


def _round_up(x, m):
    return -(-x // m) * m


def _vmem_capacity_bytes():
    try:
        return int(pltpu.get_tpu_info().vmem_capacity_bytes)
    except Exception:
        return 64 * 1024 * 1024          # conservative (v7x); v5e/v6e have 128 MiB


def _choose_tk(c, hw, itemsize, tk_override=None):
    """Lane-tile size: multiple of 128, as large as the VMEM budget allows."""
    hw_ceil = _round_up(max(hw, 1), 128)
    if tk_override is not None:
        return min(_round_up(tk_override, 128), hw_ceil)
    cap = _vmem_capacity_bytes()
    # Double-buffered (C, TK) feature tiles get ~half of VMEM; the rest is for
    # the resident Gram / target blocks and compiler scratch.
    per_tile_budget = max(cap // 4, 2 * 1024 * 1024)
    tk = max(128, (per_tile_budget // max(c * itemsize, 1)) // 128 * 128)
    return min(tk, hw_ceil)


def _make_kernel(c, hw, tk):
    inv_norm = 1.0 / float(c * hw)
    inv_cc = 1.0 / float(c * c)
    ragged = (hw % tk) != 0

    def kernel(feat_ref, tgt_ref, g_ref, loss_ref):
        ki = pl.program_id(0)

        @pl.when(ki == 0)
        def _():
            g_ref[...] = jnp.zeros_like(g_ref)

        f = feat_ref[...]                      # (C, TK), native dtype
        if ragged:
            # Mask lanes past the true HW extent of the feature map (the tail
            # block of a ragged HW); zero columns contribute nothing to F@F.T.
            col = jax.lax.broadcasted_iota(jnp.int32, f.shape, 1) + ki * tk
            f = jnp.where(col < hw, f, jnp.zeros_like(f))

        g_ref[...] += jax.lax.dot_general(     # F_tile @ F_tile.T on the MXU
            f, f,
            dimension_numbers=(((1,), (1,)), ((), ())),
            preferred_element_type=jnp.float32,
        )

        @pl.when(ki == pl.num_programs(0) - 1)
        def _():
            g = g_ref[...] * jnp.float32(inv_norm)
            g_ref[...] = g
            diff = g - tgt_ref[...]
            loss_ref[0] = jnp.sum(diff * diff) * jnp.float32(inv_cc)

    return kernel


def _gram_and_loss(x, target_g, *, tk_override=None):
    """x: (1, C, H, W). Returns (G = F@F.T / (C*H*W) as (C, C) f32, MSE(G, target_g))."""
    b, c, h, w = x.shape
    if b != 1:
        raise ValueError("gram_matrix (like the torch version) assumes batch == 1")
    hw = h * w
    feats = x.reshape(c, hw)                   # metadata-only, no HBM copy
    itemsize = feats.dtype.itemsize

    tk = _choose_tk(c, hw, itemsize, tk_override)
    num_k = -(-hw // tk)

    cap = _vmem_capacity_bytes()
    needed = 2 * c * tk * itemsize + 3 * c * c * 4 + (2 << 20)
    vmem_limit = int(min(max(needed, 16 << 20), cap - (8 << 20)))

    g, loss = pl.pallas_call(
        _make_kernel(c, hw, tk),
        out_shape=(
            jax.ShapeDtypeStruct((c, c), jnp.float32),
            jax.ShapeDtypeStruct((1,), jnp.float32),
        ),
        grid=(num_k,),
        in_specs=[
            pl.BlockSpec((c, tk), lambda k: (0, k)),     # streamed feature tiles
            pl.BlockSpec((c, c), lambda k: (0, 0)),      # resident target Gram
        ],
        out_specs=(
            pl.BlockSpec((c, c), lambda k: (0, 0)),      # resident Gram accumulator
            pl.BlockSpec(memory_space=pltpu.MemorySpace.SMEM),   # scalar loss
        ),
        compiler_params=pltpu.CompilerParams(
            dimension_semantics=("arbitrary",),
            vmem_limit_bytes=vmem_limit,
        ),
        cost_estimate=pl.CostEstimate(
            flops=2 * c * c * hw,
            transcendentals=0,
            bytes_accessed=c * hw * itemsize + 2 * c * c * 4,
        ),
    )(feats, target_g.astype(jnp.float32))
    return g, loss[0]


def gram_matrix(x):
    """x: (1, C, H, W) -> (C, C) Gram matrix divided by C*H*W, float32."""
    _, c, _, _ = x.shape
    g, _ = _gram_and_loss(x, jnp.zeros((c, c), jnp.float32))
    return g


class StyleLoss:
    """JAX/Pallas port of the PyTorch StyleLoss module (forward pass)."""

    def __init__(self, target_feature):
        self.target = gram_matrix(target_feature)      # detached constant
        self.loss = None

    def __call__(self, x):
        # NOTE: like the torch module, the loss is stored as a side effect;
        # intended for eager use (fragile under jax.jit of the module call).
        _, self.loss = _gram_and_loss(x, self.target)
        return x                                        # forward returns its input


def _ref_gram(t):
    b, c, h, w = t.shape
    f = t.reshape(c, h * w).astype(jnp.float32)
    return (f @ f.T) / (c * h * w)


if __name__ == "__main__":
    key = jax.random.PRNGKey(0)
    k1, k2, k3, k4 = jax.random.split(key, 4)

    # Case 1: small aligned case (single lane tile), C=8, H=W=16.
    x1 = jax.random.normal(k1, (1, 8, 16, 16), dtype=jnp.float32)
    t1 = jax.random.normal(k2, (1, 8, 16, 16), dtype=jnp.float32)
    mod = StyleLoss(t1)
    out = mod(x1)
    jax.block_until_ready(out)
    jax.block_until_ready(mod.loss)
    loss_ref = jnp.mean((_ref_gram(x1) - _ref_gram(t1)) ** 2)
    assert jnp.allclose(out, x1), "forward must return its input unchanged"
    assert jnp.allclose(mod.loss, loss_ref, rtol=1e-3, atol=1e-6), (
        float(mod.loss), float(loss_ref))

    # Case 2: ragged HW (400, not a multiple of 128) and unaligned C=6,
    # exercising the in-kernel tail masking on the default (auto-TK) path.
    x2 = jax.random.normal(k3, (1, 6, 20, 20), dtype=jnp.float32)
    t2 = jax.random.normal(k4, (1, 6, 20, 20), dtype=jnp.float32)
    mod2 = StyleLoss(t2)
    out2 = mod2(x2)
    jax.block_until_ready(out2)
    jax.block_until_ready(mod2.loss)
    loss2_ref = jnp.mean((_ref_gram(x2) - _ref_gram(t2)) ** 2)
    assert jnp.allclose(out2, x2)
    assert jnp.allclose(mod2.loss, loss2_ref, rtol=1e-3, atol=1e-6), (
        float(mod2.loss), float(loss2_ref))

    # Case 3: force a small TK so the kernel walks multiple reduction steps
    # (accumulator path) AND masks the ragged tail block.
    tgt2 = _ref_gram(t2)
    g3, loss3 = _gram_and_loss(x2, tgt2, tk_override=128)   # 4 k-steps, tail = 16 cols
    jax.block_until_ready(loss3)
    assert jnp.allclose(g3, _ref_gram(x2), rtol=1e-3, atol=1e-5)
    loss3_ref = jnp.mean((_ref_gram(x2) - tgt2) ** 2)
    assert jnp.allclose(loss3, loss3_ref, rtol=1e-3, atol=1e-6), (
        float(loss3), float(loss3_ref))

    print("KERNEL_OK")
</pallas_src>

<mosaic_0001>
module attributes {stable_mosaic.version = 11 : i64} {
  func.func @kernel(%arg0: i32, %arg1: memref<8x256xf32, #tpu.memory_space<vmem>>, %arg2: memref<8x8xf32, #tpu.memory_space<vmem>>, %arg3: memref<8x8xf32, #tpu.memory_space<vmem>>, %arg4: memref<1xf32, #tpu.memory_space<smem>>) attributes {dimension_semantics = [#tpu.dimension_semantics<arbitrary>], iteration_bounds = array<i64: 1>, scalar_prefetch = 0 : i64, scratch_operands = 0 : i64, tpu.core_type = #tpu.core_type<tc>, window_params = [{transform_indices = @transform_0, window_bounds = array<i64: 8, 256>}, {pipeline_mode = #tpu.pipeline_mode<synchronous>, transform_indices = @transform_1, window_bounds = array<i64: 8, 8>}, {pipeline_mode = #tpu.pipeline_mode<synchronous>, transform_indices = @transform_2, window_bounds = array<i64: 8, 8>}, {transform_indices = @transform_3, window_bounds = array<i64: 1>}]} {
    %c0_i32 = arith.constant 0 : i32
    %0 = arith.cmpi eq, %arg0, %c0_i32 : i32
    %1 = arith.extui %0 : i1 to i32
    %c0_i32_0 = arith.constant 0 : i32
    %2 = arith.cmpi ne, %1, %c0_i32_0 : i32
    scf.if %2 {
      %cst_8 = arith.constant 0.000000e+00 : f32
      %11 = vector.broadcast %cst_8 : f32 to vector<8x8xf32>
      %c0_9 = arith.constant 0 : index
      %c0_10 = arith.constant 0 : index
      %12 = vector.load %arg3[%c0_9, %c0_10] : memref<8x8xf32, #tpu.memory_space<vmem>>, vector<8x8xf32>
      tpu.vector_store %arg3[%c0_9, %c0_10], %11 {strides = array<i32>} : memref<8x8xf32, #tpu.memory_space<vmem>>, vector<8x8xf32>,
    } else {
    }
    %c0 = arith.constant 0 : index
    %c0_1 = arith.constant 0 : index
    %3 = vector.load %arg1[%c0, %c0_1] : memref<8x256xf32, #tpu.memory_space<vmem>>, vector<8x256xf32>
    %c0_2 = arith.constant 0 : index
    %c0_3 = arith.constant 0 : index
    %4 = vector.load %arg3[%c0_2, %c0_3] : memref<8x8xf32, #tpu.memory_space<vmem>>, vector<8x8xf32>
    %cst = arith.constant dense<0.000000e+00> : vector<8x8xf32>
    %5 = tpu.matmul %3, %3, %cst {dimension_numbers = #tpu.dot_dimension_numbers<[1], [1], [0], [0], [0, 0, 1, 0], [], []>} : vector<8x256xf32>, vector<8x256xf32>, vector<8x8xf32> -> vector<8x8xf32>
    %6 = arith.addf %4, %5 : vector<8x8xf32>
    %c0_4 = arith.constant 0 : index
    %c0_5 = arith.constant 0 : index
    %7 = vector.load %arg3[%c0_4, %c0_5] : memref<8x8xf32, #tpu.memory_space<vmem>>, vector<8x8xf32>
    tpu.vector_store %arg3[%c0_4, %c0_5], %6 {strides = array<i32>} : memref<8x8xf32, #tpu.memory_space<vmem>>, vector<8x8xf32>,
    %c0_i32_6 = arith.constant 0 : i32
    %8 = arith.cmpi eq, %arg0, %c0_i32_6 : i32
    %9 = arith.extui %8 : i1 to i32
    %c0_i32_7 = arith.constant 0 : i32
    %10 = arith.cmpi ne, %9, %c0_i32_7 : i32
    scf.if %10 {
      %c0_8 = arith.constant 0 : index
      %c0_9 = arith.constant 0 : index
      %11 = vector.load %arg3[%c0_8, %c0_9] : memref<8x8xf32, #tpu.memory_space<vmem>>, vector<8x8xf32>
      %cst_10 = arith.constant 4.8828125E-4 : f32
      %12 = vector.broadcast %cst_10 : f32 to vector<8x8xf32>
      %13 = arith.mulf %11, %12 : vector<8x8xf32>
      %c0_11 = arith.constant 0 : index
      %c0_12 = arith.constant 0 : index
      %14 = vector.load %arg3[%c0_11, %c0_12] : memref<8x8xf32, #tpu.memory_space<vmem>>, vector<8x8xf32>
      tpu.vector_store %arg3[%c0_11, %c0_12], %13 {strides = array<i32>} : memref<8x8xf32, #tpu.memory_space<vmem>>, vector<8x8xf32>,
      %c0_13 = arith.constant 0 : index
      %c0_14 = arith.constant 0 : index
      %15 = vector.load %arg2[%c0_13, %c0_14] : memref<8x8xf32, #tpu.memory_space<vmem>>, vector<8x8xf32>
      %16 = arith.subf %13, %15 : vector<8x8xf32>
      %17 = arith.mulf %16, %16 : vector<8x8xf32>
      %18 = vector.shape_cast %17 : vector<8x8xf32> to vector<1x8x8xf32>
      %cst_15 = arith.constant dense<0.000000e+00> : vector<1xf32>
      %19 = vector.multi_reduction <add>, %18, %cst_15 [1, 2] : vector<1x8x8xf32> to vector<1xf32>
      %20 = vector.shape_cast %19 : vector<1xf32> to vector<1x1x1xf32>
      %21 = vector.extract %20[0, 0, 0] : f32 from vector<1x1x1xf32>
      %cst_16 = arith.constant 1.562500e-02 : f32
      %22 = arith.mulf %21, %cst_16 : f32
      %c0_17 = arith.constant 0 : index
      %23 = memref.load %arg4[%c0_17] : memref<1xf32, #tpu.memory_space<smem>>
      memref.store %22, %arg4[%c0_17] : memref<1xf32, #tpu.memory_space<smem>>
    } else {
    }
    return
  }
  func.func @transform_0(%arg0: i32) -> (i32, i32) {
    %c0_i32 = arith.constant 0 : i32
    %c0_i32_0 = arith.constant 0 : i32
    return %c0_i32, %arg0 : i32, i32
  }
  func.func @transform_1(%arg0: i32) -> (i32, i32) {
    %c0_i32 = arith.constant 0 : i32
    %c0_i32_0 = arith.constant 0 : i32
    %c0_i32_1 = arith.constant 0 : i32
    return %c0_i32, %c0_i32_0 : i32, i32
  }
  func.func @transform_2(%arg0: i32) -> (i32, i32) {
    %c0_i32 = arith.constant 0 : i32
    %c0_i32_0 = arith.constant 0 : i32
    %c0_i32_1 = arith.constant 0 : i32
    return %c0_i32, %c0_i32_0 : i32, i32
  }
  func.func @transform_3(%arg0: i32) -> i32 {
    %c0_i32 = arith.constant 0 : i32
    %c0_i32_0 = arith.constant 0 : i32
    return %c0_i32 : i32
  }
}

</mosaic_0001>

<llo_original>
// kernel: tpu_custom_call.1
$region0: #{tpu_custom_call.1}
  #allocation0 [shape = 'u32[]', space=smem, size = 0x4, offset = 0x4, fixed_abs, tag = 'smem constant byte address 0x4 - core index']
  #allocation1 [shape = 'u32[144,128]{1,0:T(1,128)}', space=vmem, size = 0x12000, scoped, tag = 'internal scratch']
  %s0 = inlined_call_operand.hbm [shape: f32[8,256], index: 0, kind: input, shape index: {}]
  %s1 = inlined_call_operand.hbm [shape: f32[8,8], index: 1, kind: input, shape index: {}]
  %s2 = inlined_call_operand.hbm [shape: f32[8,8], index: 2, kind: output, shape index: {0}]
  %s3 = inlined_call_operand.hbm [shape: f32[1], index: 3, kind: output, shape index: {1}]
  %4 = xla_tuple %s2, %s3
  %s5 = sld [smem:[#allocation0]]
  $region42: #{tpu_custom_call.1} parent=0
    _
  %s7 = ssub.s32 1, %s5
  %s8 = scalar_select 0, %s7, %s5
  $region1: #{tpu_custom_call.1} parent=0
    #allocation2 [shape = 'u8[8192]{0}', space=vmem, size = 0x2000, scoped, tag = 'input window, operand 0, single buffered']
    #allocation3 [shape = 's32[1]{0}', space=sflag, size = 0x4, scoped, tag = 'scoped memory for tpu_custom_call.1']
    #allocation4 [shape = 's32[1]{0}', space=sflag, size = 0x4, scoped, tag = 'scoped memory for tpu_custom_call.1']
    #allocation5 [shape = 's32[1]{0}', space=sflag, size = 0x4, scoped, tag = 'scoped memory for tpu_custom_call.1']
    #allocation6 [shape = 'u8[4096]{0}', space=vmem, size = 0x1000, scoped, tag = 'input window, operand 1, single buffered']
    #allocation7 [shape = 's32[1]{0}', space=sflag, size = 0x4, scoped, tag = 'scoped memory for tpu_custom_call.1']
    #allocation8 [shape = 'u8[4096]{0}', space=vmem, size = 0x1000, scoped, tag = 'output window, operand 0, single buffered']
    #allocation9 [shape = 'u8[512]{0}', space=smem, size = 0x200, scoped, tag = 'output window, operand 1, single buffered']
    %9 = vsyncpa [#allocation3], 0
    %10 = vsyncpa [#allocation7], 0
    %11 = vsyncpa [#allocation4], 0
    %12 = vsyncpa [#allocation5], 0
    // Predicated region
    $region2: #{tpu_custom_call.1} parent=1 // pred_check
      _
    $region3: #{tpu_custom_call.1} parent=1 // pred_check_branch
      %14 = sbr.rel (0) target = $region5
    $region4: #{tpu_custom_call.1} parent=1 // pred_region
      %s16 = ssub.s32 256, 256
      %17 = vsyncadd [#allocation3], %s16
      %s19 = sshll.u32 [#allocation2], 4
      %s20 = int_to_ptr.vmem [resolvable:$true] %s19
      %22 = dma.hbm_to_vmem [thread:$0]  %s0, 256, %s20, [#allocation3]
    $region5: #{tpu_custom_call.1} parent=1 // pred_fallthru
      _
    // Predicated region
    $region6: #{tpu_custom_call.1} parent=1 // pred_check
      _
    $region7: #{tpu_custom_call.1} parent=1 // pred_check_branch
      %24 = sbr.rel (0) target = $region9
    $region8: #{tpu_custom_call.1} parent=1 // pred_region
      %s26 = ssub.s32 128, 128
      %27 = vsyncadd [#allocation7], %s26
      %s29 = sshll.u32 [#allocation6], 4
      %s30 = int_to_ptr.vmem [resolvable:$true] %s29
      %32 = dma.hbm_to_vmem [thread:$0]  %s1, 128, %s30, [#allocation7]
    $region9: #{tpu_custom_call.1} parent=1 // pred_fallthru
      _
    // Predicated region
    $region10: #{tpu_custom_call.1} parent=1 // pred_check
      _
    $region11: #{tpu_custom_call.1} parent=1 // pred_check_branch
      %34 = sbr.rel (0) target = $region13
    $region12: #{tpu_custom_call.1} parent=1 // pred_region
      %35 = dma.done [#allocation3], 256
    $region13: #{tpu_custom_call.1} parent=1 // pred_fallthru
      _
    // Predicated region
    $region14: #{tpu_custom_call.1} parent=1 // pred_check
      _
    $region15: #{tpu_custom_call.1} parent=1 // pred_check_branch
      %37 = sbr.rel (0) target = $region17
    $region16: #{tpu_custom_call.1} parent=1 // pred_region
      %38 = dma.done [#allocation7], 128
    $region17: #{tpu_custom_call.1} parent=1 // pred_fallthru
      _
    %p39 = scmp.eq.s32.totalorder 0, 0
    // Predicated region
    $region18: #{tpu_custom_call.1} parent=1 // pred_check
      %p40 = pneg %p39
    $region19: #{tpu_custom_call.1} parent=1 // pred_check_branch
      %42 = sbr.rel (%p40) target = $region21
    $region20: #{tpu_custom_call.1} parent=1 // pred_region
      %vm43 = vcmask 64512
      %44 = vst.msk [vmem:[#allocation8] sm:$0xff] %vm43, 0.0
    $region21: #{tpu_custom_call.1} parent=1 // pred_fallthru
      _
    %v45 = vld [vmem:[#allocation2] sm:$0xff]
    %v46 = vld [vmem:[#allocation2 + $0x8] sm:$0xff]
    %v47 = vld [vmem:[#allocation8] sm:$0xff]
    %48 = vmatprep.subr.mxu0 0.0
    %49 = vmatpush1.xpose.msra.mxu0 0.0
    %50 = vmatprep.subr.mxu0 0.0
    %51 = vmatpush1.xpose.msra.mxu0 0.0
    %52 = vmatprep.subr.mxu0 0.0
    %53 = vmatpush1.xpose.msra.mxu0 0.0
    %54 = vmatprep.subr.mxu0 0.0
    %55 = vmatpush1.xpose.msra.mxu0 0.0
    %56 = vmatprep.subr.mxu0 0.0
    %57 = vmatpush1.xpose.msra.mxu0 0.0
    %58 = vmatprep.subr.mxu0 0.0
    %59 = vmatpush1.xpose.msra.mxu0 0.0
    %60 = vmatprep.subr.mxu0 0.0
    %61 = vmatpush1.xpose.msra.mxu0 0.0
    %62 = vmatprep.subr.mxu0 0.0
    %63 = vmatpush1.xpose.msra.mxu0 0.0
    %64 = vmatprep.subr.mxu0 0.0
    %65 = vmatpush1.xpose.msra.mxu0 0.0
    %66 = vmatprep.subr.mxu0 0.0
    %67 = vmatpush1.xpose.msra.mxu0 0.0
    %68 = vmatprep.subr.mxu0 0.0
    %69 = vmatpush1.xpose.msra.mxu0 0.0
    %70 = vmatprep.subr.mxu0 0.0
    %71 = vmatpush1.xpose.msra.mxu0 0.0
    %72 = vmatprep.subr.mxu0 0.0
    %73 = vmatpush1.xpose.msra.mxu0 0.0
    %74 = vmatprep.subr.mxu0 0.0
    %75 = vmatpush1.xpose.msra.mxu0 0.0
    %76 = vmatprep.subr.mxu0 0.0
    %77 = vmatpush1.xpose.msra.mxu0 0.0
    %78 = vmatprep.subr.mxu0 %v46
    %79 = vmatpush1.xpose.msra.mxu0 %v45
    %80 = vmatprep.subr.mxu0 0.0
    %81 = vmatpush2.xpose.msra.mxu0 0.0
    %82 = vmatprep.subr.mxu0 0.0
    %83 = vmatpush2.xpose.msra.mxu0 0.0
    %84 = vmatprep.subr.mxu0 0.0
    %85 = vmatpush2.xpose.msra.mxu0 0.0
    %86 = vmatprep.subr.mxu0 0.0
    %87 = vmatpush2.xpose.msra.mxu0 0.0
    %88 = vmatprep.subr.mxu0 0.0
    %89 = vmatpush2.xpose.msra.mxu0 0.0
    %90 = vmatprep.subr.mxu0 0.0
    %91 = vmatpush2.xpose.msra.mxu0 0.0
    %92 = vmatprep.subr.mxu0 0.0
    %93 = vmatpush2.xpose.msra.mxu0 0.0
    %94 = vmatprep.subr.mxu0 0.0
    %95 = vmatpush2.xpose.msra.mxu0 0.0
    %96 = vmatprep.subr.mxu0 0.0
    %97 = vmatpush2.xpose.msra.mxu0 0.0
    %98 = vmatprep.subr.mxu0 0.0
    %99 = vmatpush2.xpose.msra.mxu0 0.0
    %100 = vmatprep.subr.mxu0 0.0
    %101 = vmatpush2.xpose.msra.mxu0 0.0
    %102 = vmatprep.subr.mxu0 0.0
    %103 = vmatpush2.xpose.msra.mxu0 0.0
    %104 = vmatprep.subr.mxu0 0.0
    %105 = vmatpush2.xpose.msra.mxu0 0.0
    %106 = vmatprep.subr.mxu0 0.0
    %107 = vmatpush2.xpose.msra.mxu0 0.0
    %108 = vmatprep.subr.mxu0 0.0
    %109 = vmatpush2.xpose.msra.mxu0 0.0
    %110 = vmatprep.subr.mxu0 0.0
    %111 = vmatpush2.xpose.msra.mxu0 0.0
    %112 = vmatprep.mubr.f32.mxu0 %v46
    %113 = vmatmul.mubr.f32.gmra.mxu0 %v45
    %v114 = vpop.f32.mrf.mxu0
    %v115 = vadd.f32 0.0, %v114
    %v116 = vpop.f32.mrf.mxu0
    %117 = vdwg.mxu0
    %v118 = vadd.f32 %v47, %v115
    %vm119 = vcmask 64512
    %120 = vst.msk [vmem:[#allocation8] sm:$0xff] %vm119, %v118
    // Predicated region
    $region22: #{tpu_custom_call.1} parent=1 // pred_check
      %p121 = pneg %p39
    $region23: #{tpu_custom_call.1} parent=1 // pred_check_branch
      %123 = sbr.rel (%p121) target = $region25
    $region24: #{tpu_custom_call.1} parent=1 // pred_region
      %v124 = vld [vmem:[#allocation8] sm:$0xff]
      %v125 = vmul.f32 %v124, 0.00048828125
      %126 = vst.msk [vmem:[#allocation8] sm:$0xff] %vm119, %v125
      %v127 = vld [vmem:[#allocation6] sm:$0xff]
      %v128 = vsub.f32 %v125, %v127
      %v129 = vmul.f32 %v128, %v128
      %v130 = vsel %vm119, %v129, 0.0
      %131 = vadd.xlane.f32.xlu0 %v130
      %v132 = vpop.xlane.xlu0 %131
      %v133 = vrot.slane %v132, 4
      %v134 = vadd.f32 %v132, %v133
      %v135 = vrot.slane %v134, 2
      %v136 = vadd.f32 %v134, %v135
      %v137 = vrot.slane %v136, 1
      %v138 = vadd.f32 %v136, %v137
      %s139 = vtos %v138
      %s140 = smul.f32 %s139, 0.015625
      %s141 = scalar_lea.smem [#allocation9], 0
      %142 = sst [smem:[%s141]] %s140
    $region25: #{tpu_custom_call.1} parent=1 // pred_fallthru
      _
    // Predicated region
    $region26: #{tpu_custom_call.1} parent=1 // pred_check
      _
    $region27: #{tpu_custom_call.1} parent=1 // pred_check_branch
      %144 = sbr.rel (0) target = $region29
    $region28: #{tpu_custom_call.1} parent=1 // pred_region
      %s146 = ssub.s32 128, 128
      %147 = vsyncadd [#allocation4], %s146
      %s149 = sshll.u32 [#allocation8], 4
      %s150 = int_to_ptr.vmem [resolvable:$true] %s149
      %152 = dma.vmem_to_hbm [thread:$0]  %s150, 128, %s2, [#allocation4]
    $region29: #{tpu_custom_call.1} parent=1 // pred_fallthru
      _
    // Predicated region
    $region30: #{tpu_custom_call.1} parent=1 // pred_check
      _
    $region31: #{tpu_custom_call.1} parent=1 // pred_check_branch
      %154 = sbr.rel (0) target = $region33
    $region32: #{tpu_custom_call.1} parent=1 // pred_region
      %s156 = ssub.s32 16, 16
      %157 = vsyncadd [#allocation5], %s156
      %160 = dma.smem_to_hbm [#allocation9], 16, %s3, [#allocation5]
    $region33: #{tpu_custom_call.1} parent=1 // pred_fallthru
      _
    // Predicated region
    $region34: #{tpu_custom_call.1} parent=1 // pred_check
      _
    $region35: #{tpu_custom_call.1} parent=1 // pred_check_branch
      %162 = sbr.rel (0) target = $region37
    $region36: #{tpu_custom_call.1} parent=1 // pred_region
      %163 = dma.done [#allocation4], 128
    $region37: #{tpu_custom_call.1} parent=1 // pred_fallthru
      _
    // Predicated region
    $region38: #{tpu_custom_call.1} parent=1 // pred_check
      _
    $region39: #{tpu_custom_call.1} parent=1 // pred_check_branch
      %165 = sbr.rel (0) target = $region41
    $region40: #{tpu_custom_call.1} parent=1 // pred_region
      %166 = dma.done [#allocation5], 16
    $region41: #{tpu_custom_call.1} parent=1 // pred_fallthru
      _
    %167 = sfence
    %168 = vsyncpa [#allocation3], 1
    %169 = vsyncpa [#allocation7], 1
    %170 = vsyncpa [#allocation4], 1
    %171 = vsyncpa [#allocation5], 1

</llo_original>
